<compile_context>
chip_gen: v6e
topology: v6e:2x2x1
jax: 0.10.0
libtpu: 0.0.40
codegen_flags: <defaults>
</compile_context>

<pallas_src>
import functools

import jax
import jax.numpy as jnp
from jax.experimental import pallas as pl
from jax.experimental.pallas import tpu as pltpu

_LANE = 128


def _cdiv(a, b):
    return -(-a // b)


def _round_up(a, b):
    return _cdiv(a, b) * b


def _fscore_sums_kernel(x_ref, t_ref, out_ref, *, C, threshold, row_tile, lane,
                        sub, n_inner, mask_mode, valid_rows, valid_pixels):
    # x_ref, t_ref: (C, row_tile, lane) in their native HBM dtype.
    # out_ref:      (3*C, sub, lane) f32, resident across the inner grid axis:
    #               rows [0:C)   -> sum of softmax predictions
    #               rows [C:2C)  -> sum of ground truth
    #               rows [2C:3C) -> sum of pr * gt (true positives)
    pi = pl.program_id(2)

    @pl.when(pi == 0)
    def _():
        out_ref[...] = jnp.zeros_like(out_ref)

    x = x_ref[...].astype(jnp.float32)
    t = t_ref[...].astype(jnp.float32)

    # Softmax over the class axis (axis 0): C is the outer slab axis, so the
    # max/sum over classes are plain elementwise VPU ops across slabs.
    m = jnp.max(x, axis=0, keepdims=True)
    e = jnp.exp(x - m)
    denom = jnp.sum(e, axis=0, keepdims=True)
    # Approx reciprocal (EUP slot, nearly free) + one Newton step: ~2^-22
    # relative error, well inside the 1e-5 rtol check, no exact-divide cost.
    r = pl.reciprocal(denom, approx=True)
    r = r * (2.0 - denom * r)
    pr = e * r

    if threshold is not None:
        pr = (pr > threshold).astype(pr.dtype)

    if mask_mode != "none":
        # Blocks may overhang the pixel axis (no wrapper padding for the tile
        # remainder): zero BOTH pr and gt for invalid rows/pixels before the
        # sums.  NaN/Inf from garbage logits cannot survive the select.
        blk = pl.program_id(1) * n_inner + pi
        row_ids = jax.lax.broadcasted_iota(jnp.int32, (row_tile, lane), 0)
        if mask_mode == "pixel":      # H*W not a multiple of 128: per-pixel
            lane_ids = jax.lax.broadcasted_iota(jnp.int32, (row_tile, lane), 1)
            gpix = (blk * row_tile + row_ids) * lane + lane_ids
            valid = (gpix < valid_pixels)[None]
        else:                         # "row": only whole 128-pixel rows invalid
            valid = ((blk * row_tile + row_ids) < valid_rows)[None]
        pr = jnp.where(valid, pr, 0.0)
        t = jnp.where(valid, t, 0.0)

    groups = row_tile // sub

    def _rsum(v):
        # (C, row_tile, lane) -> (C, sub, lane).  With sub == 8 the reshape
        # splits exactly on vreg boundaries, so the reduce is plain vreg adds
        # (no cross-sublane XLU work); the final (sub, lane) reduce is in glue.
        if groups == 1:
            return v
        return jnp.sum(v.reshape(C, groups, sub, lane), axis=1)

    out_ref[0:C] += _rsum(pr)
    out_ref[C:2 * C] += _rsum(t)
    out_ref[2 * C:3 * C] += _rsum(pr * t)


def fscore_metric(inp, target, *, threshold=None, beta=1.0, eps=1e-7,
                  _max_block_bytes=None):
    """JAX/Pallas equivalent of Fscore.forward(input, target), NCHW inputs."""
    assert inp.shape == target.shape
    N, C, H, W = inp.shape
    assert C >= 2, "Fscore skips class 0; need at least 2 classes"
    # TODO(synk): class_weights in the original module is constructed but never
    # used in forward(), so it is intentionally omitted here.

    P = H * W
    R = _cdiv(P, _LANE)
    pad_pixels = R * _LANE - P

    # Free reshapes to the lane-dense (N, C, R, 128) class-slab view.
    x = inp.reshape(N, C, P)
    t = target.reshape(N, C, P)
    if pad_pixels:
        # TODO(synk): a fully pad-free path for H*W % 128 != 0 would require
        # giving up the class-slab layout; the pad here is <=127 pixels/map and
        # row-tile remainders never pad (handled by in-kernel masking).
        x = jnp.pad(x, ((0, 0), (0, 0), (0, pad_pixels)))
        t = jnp.pad(t, ((0, 0), (0, 0), (0, pad_pixels)))
    x = x.reshape(N, C, R, _LANE)
    t = t.reshape(N, C, R, _LANE)

    # --- VMEM budget / tile sizing (chip-aware, safe on every generation) ----
    try:
        vmem_cap = int(getattr(pltpu.get_tpu_info(), "vmem_capacity_bytes",
                               64 << 20))
    except Exception:
        vmem_cap = 64 << 20
    # v7x-class cores have 64 MiB physical VMEM; v5e/v6e have 128 MiB.  Both
    # limits below are safe even if the capacity query is per-chip not per-core.
    vmem_limit = (44 << 20) if vmem_cap <= (80 << 20) else (56 << 20)

    bytes_per_row = C * _LANE * (jnp.dtype(inp.dtype).itemsize +
                                 jnp.dtype(target.dtype).itemsize)
    # One pipeline step holds both input tiles; double buffering makes it x4.
    block_budget = _max_block_bytes or (vmem_limit // 5)
    max_row_tile = max(32, (block_budget // bytes_per_row) // 32 * 32)

    if R <= max_row_tile and (R % 8 == 0 or R <= 256):
        row_tile = R                                   # single row tile
    else:
        n_tiles = max(2, _cdiv(R, max_row_tile))
        # Multiple of 32 -> dense sublane packing for f32 / bf16 / int8 inputs.
        row_tile = min(max_row_tile, _round_up(_cdiv(R, n_tiles), 32))
    num_p = _cdiv(R, row_tile)
    sub = 8 if row_tile % 8 == 0 else row_tile

    # Guarantee a "parallel" grid axis even when N == 1 (v7x: 2 TensorCores).
    if N > 1 or num_p == 1:
        n_outer = 1
    elif num_p % 2 == 0:
        n_outer = 2
    else:
        n_outer = num_p
    n_inner = num_p // n_outer

    if pad_pixels:
        mask_mode = "pixel"            # mask padded lanes + any overhang rows
    elif num_p * row_tile != R:
        mask_mode = "row"              # mask overhang rows of the last tile
    else:
        mask_mode = "none"

    kernel = functools.partial(
        _fscore_sums_kernel,
        C=C, threshold=threshold, row_tile=row_tile, lane=_LANE, sub=sub,
        n_inner=n_inner, mask_mode=mask_mode, valid_rows=R, valid_pixels=P)

    partials = pl.pallas_call(
        kernel,
        out_shape=jax.ShapeDtypeStruct((N * n_outer, 3 * C, sub, _LANE),
                                       jnp.float32),
        grid=(N, n_outer, n_inner),
        in_specs=[
            pl.BlockSpec((None, C, row_tile, _LANE),
                         lambda n, o, p: (n, 0, o * n_inner + p, 0)),
            pl.BlockSpec((None, C, row_tile, _LANE),
                         lambda n, o, p: (n, 0, o * n_inner + p, 0)),
        ],
        out_specs=pl.BlockSpec((None, 3 * C, sub, _LANE),
                               lambda n, o, p: (n * n_outer + o, 0, 0, 0)),
        compiler_params=pltpu.CompilerParams(
            dimension_semantics=("parallel", "parallel", "arbitrary"),
            vmem_limit_bytes=vmem_limit),
    )(x, t)

    # Tiny final reduction + scalar F-score combination in JAX glue.
    sums = jnp.sum(partials.reshape(N * n_outer, 3, C, sub, _LANE),
                   axis=(0, 3, 4))                        # (3, C)
    sum_pr, sum_gt, sum_tp = sums[0], sums[1], sums[2]

    b2 = beta ** 2
    scores = []
    for i in range(1, C):
        tp = sum_tp[i]
        fp = sum_pr[i] - tp
        fn = sum_gt[i] - tp
        scores.append(((1.0 + b2) * tp + eps) /
                      ((1.0 + b2) * tp + b2 * fn + fp + eps))
    return sum(scores) / len(scores)


def _fscore_metric_ref(inp, target, *, threshold=None, beta=1.0, eps=1e-7):
    """Pure-JAX reference (mirrors the PyTorch module)."""
    pr_all = jax.nn.softmax(inp.astype(jnp.float32), axis=1)
    gt_all = target.astype(jnp.float32)
    b2 = beta ** 2
    scores = []
    for i in range(1, inp.shape[1]):
        pr = pr_all[:, i, :, :]
        gt = gt_all[:, i, :, :]
        if threshold is not None:
            pr = (pr > threshold).astype(pr.dtype)
        tp = jnp.sum(gt * pr)
        fp = jnp.sum(pr) - tp
        fn = jnp.sum(gt) - tp
        scores.append(((1.0 + b2) * tp + eps) /
                      ((1.0 + b2) * tp + b2 * fn + fp + eps))
    return sum(scores) / len(scores)


def _make_inputs(key, N, C, H, W, target_dtype=jnp.float32):
    k1, k2 = jax.random.split(key)
    logits = jax.random.normal(k1, (N, C, H, W), dtype=jnp.float32)
    labels = jax.random.randint(k2, (N, H, W), 0, C)
    target = jax.nn.one_hot(labels, C, dtype=target_dtype)   # (N, H, W, C)
    target = jnp.transpose(target, (0, 3, 1, 2))              # NCHW
    return logits, target


if __name__ == "__main__":
    key = jax.random.PRNGKey(0)
    ks = jax.random.split(key, 6)

    # 1) Main NCHW case (H*W multiple of 128: no padding, no masking).
    logits, target = _make_inputs(ks[0], 2, 4, 16, 16)
    out = jax.block_until_ready(fscore_metric(logits, target))
    ref = _fscore_metric_ref(logits, target)
    assert jnp.allclose(out, ref, rtol=1e-5, atol=1e-6), (out, ref)

    # 2) H*W not a multiple of 128 -> minimal pad + in-kernel pixel mask.
    logits, target = _make_inputs(ks[1], 2, 4, 12, 12)
    out = jax.block_until_ready(fscore_metric(logits, target))
    ref = _fscore_metric_ref(logits, target)
    assert jnp.allclose(out, ref, rtol=1e-5, atol=1e-6), (out, ref)

    # 3) Threshold (binarized predictions) path.
    logits, target = _make_inputs(ks[2], 1, 3, 16, 16)
    out = jax.block_until_ready(fscore_metric(logits, target, threshold=0.3))
    ref = _fscore_metric_ref(logits, target, threshold=0.3)
    assert jnp.allclose(out, ref, rtol=1e-4, atol=1e-6), (out, ref)

    # 4) bf16 one-hot target (exact 0/1): halves the target's HBM traffic.
    logits, target = _make_inputs(ks[3], 2, 4, 16, 16, target_dtype=jnp.bfloat16)
    out = jax.block_until_ready(fscore_metric(logits, target))
    ref = _fscore_metric_ref(logits, target)
    assert jnp.allclose(out, ref, rtol=1e-5, atol=1e-6), (out, ref)

    # 5) Multi-tile streaming with row-overhang masking (no wrapper pad) and
    #    accumulation across the inner "arbitrary" axis (small block budget
    #    forces tiling; R=264 rows, row_tile=32 -> 9 tiles, 24 masked rows).
    logits, target = _make_inputs(ks[4], 2, 3, 176, 192)
    out = jax.block_until_ready(
        fscore_metric(logits, target, _max_block_bytes=96 * 1024))
    ref = _fscore_metric_ref(logits, target)
    assert jnp.allclose(out, ref, rtol=1e-4, atol=1e-6), (out, ref)

    # 6) N == 1 with multiple pixel tiles -> outer "parallel" split (keeps both
    #    v7x TensorCores busy) + row masking + threshold.
    logits, target = _make_inputs(ks[5], 1, 3, 176, 192)
    out = jax.block_until_ready(
        fscore_metric(logits, target, threshold=0.25,
                      _max_block_bytes=96 * 1024))
    ref = _fscore_metric_ref(logits, target, threshold=0.25)
    assert jnp.allclose(out, ref, rtol=1e-4, atol=1e-6), (out, ref)

    print("KERNEL_OK")
</pallas_src>

<mosaic_0001>
module attributes {stable_mosaic.version = 11 : i64} {
  func.func @_fscore_sums_kernel(%arg0: i32, %arg1: i32, %arg2: i32, %arg3: memref<1x4x2x128xf32, #tpu.memory_space<vmem>>, %arg4: memref<1x4x2x128xf32, #tpu.memory_space<vmem>>, %arg5: memref<1x12x2x128xf32, #tpu.memory_space<vmem>>) attributes {dimension_semantics = [#tpu.dimension_semantics<parallel>, #tpu.dimension_semantics<parallel>, #tpu.dimension_semantics<arbitrary>], iteration_bounds = array<i64: 2, 1, 1>, scalar_prefetch = 0 : i64, scratch_operands = 0 : i64, tpu.core_type = #tpu.core_type<tc>, window_params = [{transform_indices = @transform_0, window_bounds = array<i64: 1, 4, 2, 128>}, {transform_indices = @transform_1, window_bounds = array<i64: 1, 4, 2, 128>}, {transform_indices = @transform_2, window_bounds = array<i64: 1, 12, 2, 128>}]} {
    %c0_i32 = arith.constant 0 : i32
    %0 = arith.cmpi eq, %arg2, %c0_i32 : i32
    %1 = arith.extui %0 : i1 to i32
    %c0_i32_0 = arith.constant 0 : i32
    %2 = arith.cmpi ne, %1, %c0_i32_0 : i32
    scf.if %2 {
      %cst_32 = arith.constant 0.000000e+00 : f32
      %40 = vector.broadcast %cst_32 : f32 to vector<12x2x128xf32>
      %c0_33 = arith.constant 0 : index
      %c0_34 = arith.constant 0 : index
      %c0_35 = arith.constant 0 : index
      %c0_36 = arith.constant 0 : index
      %41 = vector.load %arg5[%c0_33, %c0_34, %c0_35, %c0_36] : memref<1x12x2x128xf32, #tpu.memory_space<vmem>>, vector<1x12x2x128xf32>
      %42 = vector.shape_cast %41 : vector<1x12x2x128xf32> to vector<12x2x128xf32>
      %43 = vector.shape_cast %40 : vector<12x2x128xf32> to vector<1x12x2x128xf32>
      tpu.vector_store %arg5[%c0_33, %c0_34, %c0_35, %c0_36], %43 {strides = array<i32>} : memref<1x12x2x128xf32, #tpu.memory_space<vmem>>, vector<1x12x2x128xf32>,
    } else {
    }
    %c0 = arith.constant 0 : index
    %c0_1 = arith.constant 0 : index
    %c0_2 = arith.constant 0 : index
    %c0_3 = arith.constant 0 : index
    %3 = vector.load %arg3[%c0, %c0_1, %c0_2, %c0_3] : memref<1x4x2x128xf32, #tpu.memory_space<vmem>>, vector<1x4x2x128xf32>
    %4 = vector.shape_cast %3 : vector<1x4x2x128xf32> to vector<4x2x128xf32>
    %c0_4 = arith.constant 0 : index
    %c0_5 = arith.constant 0 : index
    %c0_6 = arith.constant 0 : index
    %c0_7 = arith.constant 0 : index
    %5 = vector.load %arg4[%c0_4, %c0_5, %c0_6, %c0_7] : memref<1x4x2x128xf32, #tpu.memory_space<vmem>>, vector<1x4x2x128xf32>
    %6 = vector.shape_cast %5 : vector<1x4x2x128xf32> to vector<4x2x128xf32>
    %cst = arith.constant dense<0xFF800000> : vector<2x128xf32>
    %7 = vector.multi_reduction <maximumf>, %4, %cst [0] : vector<4x2x128xf32> to vector<2x128xf32>
    %8 = vector.shape_cast %7 : vector<2x128xf32> to vector<1x2x128xf32>
    %9 = vector.broadcast %8 : vector<1x2x128xf32> to vector<4x2x128xf32>
    %10 = arith.subf %4, %9 : vector<4x2x128xf32>
    %11 = math.exp %10 : vector<4x2x128xf32>
    %cst_8 = arith.constant dense<0.000000e+00> : vector<2x128xf32>
    %12 = vector.multi_reduction <add>, %11, %cst_8 [0] : vector<4x2x128xf32> to vector<2x128xf32>
    %13 = vector.shape_cast %12 : vector<2x128xf32> to vector<1x2x128xf32>
    %14 = tpu.reciprocal %13 {approx = true} : vector<1x2x128xf32> -> vector<1x2x128xf32>
    %15 = arith.mulf %13, %14 : vector<1x2x128xf32>
    %cst_9 = arith.constant 2.000000e+00 : f32
    %16 = vector.broadcast %cst_9 : f32 to vector<1x2x128xf32>
    %17 = arith.subf %16, %15 : vector<1x2x128xf32>
    %18 = arith.mulf %14, %17 : vector<1x2x128xf32>
    %19 = vector.broadcast %18 : vector<1x2x128xf32> to vector<4x2x128xf32>
    %20 = arith.mulf %11, %19 : vector<4x2x128xf32>
    %c0_10 = arith.constant 0 : index
    %c0_11 = arith.constant 0 : index
    %c0_12 = arith.constant 0 : index
    %c0_13 = arith.constant 0 : index
    %21 = vector.load %arg5[%c0_10, %c0_11, %c0_12, %c0_13] : memref<1x12x2x128xf32, #tpu.memory_space<vmem>>, vector<1x4x2x128xf32>
    %22 = vector.shape_cast %21 : vector<1x4x2x128xf32> to vector<4x2x128xf32>
    %23 = arith.addf %22, %20 : vector<4x2x128xf32>
    %c0_14 = arith.constant 0 : index
    %c0_15 = arith.constant 0 : index
    %c0_16 = arith.constant 0 : index
    %c0_17 = arith.constant 0 : index
    %24 = vector.load %arg5[%c0_14, %c0_15, %c0_16, %c0_17] : memref<1x12x2x128xf32, #tpu.memory_space<vmem>>, vector<1x4x2x128xf32>
    %25 = vector.shape_cast %24 : vector<1x4x2x128xf32> to vector<4x2x128xf32>
    %26 = vector.shape_cast %23 : vector<4x2x128xf32> to vector<1x4x2x128xf32>
    tpu.vector_store %arg5[%c0_14, %c0_15, %c0_16, %c0_17], %26 {strides = array<i32>} : memref<1x12x2x128xf32, #tpu.memory_space<vmem>>, vector<1x4x2x128xf32>,
    %c0_18 = arith.constant 0 : index
    %c4 = arith.constant 4 : index
    %c0_19 = arith.constant 0 : index
    %c0_20 = arith.constant 0 : index
    %27 = vector.load %arg5[%c0_18, %c4, %c0_19, %c0_20] : memref<1x12x2x128xf32, #tpu.memory_space<vmem>>, vector<1x4x2x128xf32>
    %28 = vector.shape_cast %27 : vector<1x4x2x128xf32> to vector<4x2x128xf32>
    %29 = arith.addf %28, %6 : vector<4x2x128xf32>
    %c0_21 = arith.constant 0 : index
    %c4_22 = arith.constant 4 : index
    %c0_23 = arith.constant 0 : index
    %c0_24 = arith.constant 0 : index
    %30 = vector.load %arg5[%c0_21, %c4_22, %c0_23, %c0_24] : memref<1x12x2x128xf32, #tpu.memory_space<vmem>>, vector<1x4x2x128xf32>
    %31 = vector.shape_cast %30 : vector<1x4x2x128xf32> to vector<4x2x128xf32>
    %32 = vector.shape_cast %29 : vector<4x2x128xf32> to vector<1x4x2x128xf32>
    tpu.vector_store %arg5[%c0_21, %c4_22, %c0_23, %c0_24], %32 {strides = array<i32>} : memref<1x12x2x128xf32, #tpu.memory_space<vmem>>, vector<1x4x2x128xf32>,
    %c0_25 = arith.constant 0 : index
    %c8 = arith.constant 8 : index
    %c0_26 = arith.constant 0 : index
    %c0_27 = arith.constant 0 : index
    %33 = vector.load %arg5[%c0_25, %c8, %c0_26, %c0_27] : memref<1x12x2x128xf32, #tpu.memory_space<vmem>>, vector<1x4x2x128xf32>
    %34 = vector.shape_cast %33 : vector<1x4x2x128xf32> to vector<4x2x128xf32>
    %35 = arith.mulf %20, %6 : vector<4x2x128xf32>
    %36 = arith.addf %34, %35 : vector<4x2x128xf32>
    %c0_28 = arith.constant 0 : index
    %c8_29 = arith.constant 8 : index
    %c0_30 = arith.constant 0 : index
    %c0_31 = arith.constant 0 : index
    %37 = vector.load %arg5[%c0_28, %c8_29, %c0_30, %c0_31] : memref<1x12x2x128xf32, #tpu.memory_space<vmem>>, vector<1x4x2x128xf32>
    %38 = vector.shape_cast %37 : vector<1x4x2x128xf32> to vector<4x2x128xf32>
    %39 = vector.shape_cast %36 : vector<4x2x128xf32> to vector<1x4x2x128xf32>
    tpu.vector_store %arg5[%c0_28, %c8_29, %c0_30, %c0_31], %39 {strides = array<i32>} : memref<1x12x2x128xf32, #tpu.memory_space<vmem>>, vector<1x4x2x128xf32>,
    return
  }
  func.func @transform_0(%arg0: i32, %arg1: i32, %arg2: i32) -> (i32, i32, i32, i32) {
    %c1_i32 = arith.constant 1 : i32
    %0 = arith.muli %arg1, %c1_i32 : i32
    %1 = arith.addi %0, %arg2 : i32
    %c0_i32 = arith.constant 0 : i32
    %c0_i32_0 = arith.constant 0 : i32
    %c0_i32_1 = arith.constant 0 : i32
    return %arg0, %c0_i32, %1, %c0_i32_0 : i32, i32, i32, i32
  }
  func.func @transform_1(%arg0: i32, %arg1: i32, %arg2: i32) -> (i32, i32, i32, i32) {
    %c1_i32 = arith.constant 1 : i32
    %0 = arith.muli %arg1, %c1_i32 : i32
    %1 = arith.addi %0, %arg2 : i32
    %c0_i32 = arith.constant 0 : i32
    %c0_i32_0 = arith.constant 0 : i32
    %c0_i32_1 = arith.constant 0 : i32
    return %arg0, %c0_i32, %1, %c0_i32_0 : i32, i32, i32, i32
  }
  func.func @transform_2(%arg0: i32, %arg1: i32, %arg2: i32) -> (i32, i32, i32, i32) {
    %c1_i32 = arith.constant 1 : i32
    %0 = arith.muli %arg0, %c1_i32 : i32
    %1 = arith.addi %0, %arg1 : i32
    %c0_i32 = arith.constant 0 : i32
    %c0_i32_0 = arith.constant 0 : i32
    %c0_i32_1 = arith.constant 0 : i32
    %c0_i32_2 = arith.constant 0 : i32
    return %1, %c0_i32, %c0_i32_0, %c0_i32_1 : i32, i32, i32, i32
  }
}

</mosaic_0001>

<llo_original>
// kernel: tpu_custom_call.1
$region0: #{tpu_custom_call.1}
  #allocation0 [shape = 'u32[]', space=smem, size = 0x4, offset = 0x4, fixed_abs, tag = 'smem constant byte address 0x4 - core index']
  #allocation1 [shape = 'u32[144,128]{1,0:T(1,128)}', space=vmem, size = 0x12000, scoped, tag = 'internal scratch']
  %s0 = inlined_call_operand.hbm [shape: f32[2,4,2,128], index: 0, kind: input, shape index: {}]
  %s1 = inlined_call_operand.hbm [shape: f32[2,4,2,128], index: 1, kind: input, shape index: {}]
  %s2 = inlined_call_operand.hbm [shape: f32[2,12,2,128], index: 2, kind: output, shape index: {}]
  %s3 = sld [smem:[#allocation0]]
  $region53: #{tpu_custom_call.1} parent=0
    _
  %s5 = ssub.s32 1, %s3
  %s6 = scalar_select 0, %s5, %s3
  $region1: #{tpu_custom_call.1} parent=0
    #allocation2 [shape = 'u8[8192]{0}', space=vmem, size = 0x2000, scoped, tag = 'input window, operand 0']
    #allocation3 [shape = 's32[2]{0}', space=sflag, size = 0x8, scoped, tag = 'scoped memory for tpu_custom_call.1']
    #allocation4 [shape = 's32[2]{0}', space=sflag, size = 0x8, scoped, tag = 'scoped memory for tpu_custom_call.1']
    #allocation5 [shape = 'u8[8192]{0}', space=vmem, size = 0x2000, scoped, tag = 'input window, operand 1']
    #allocation6 [shape = 's32[2]{0}', space=sflag, size = 0x8, scoped, tag = 'scoped memory for tpu_custom_call.1']
    #allocation7 [shape = 'u8[24576]{0}', space=vmem, size = 0x6000, scoped, tag = 'output window, operand 0']
    %7 = vsyncpa [#allocation3], 0
    %s8 = scalar_lea.sflag [#allocation3], 1
    %9 = vsyncpa %s8, 0
    %10 = vsyncpa [#allocation6], 0
    %s11 = scalar_lea.sflag [#allocation6], 1
    %12 = vsyncpa %s11, 0
    %13 = vsyncpa [#allocation4], 0
    %s14 = scalar_lea.sflag [#allocation4], 1
    %15 = vsyncpa %s14, 0
    loop: start=0, step=1, limit=4
    $region2: #{tpu_custom_call.1} parent=1 // loop_pre_header
      _
    $region3: #{tpu_custom_call.1} parent=1 // loop_header
      %s17 = sphi 0, %s21
      %p18 = scmp.ge.s32.totalorder %s17, 4
      %s24 = sphi 0, %s43
      %s25 = sphi 0, %s39
      %s26 = sphi 0, %s35
      %s27 = sphi 0, %s24
      %s28 = sphi 0, %s25
      %s29 = sphi 0, %s26
      %s30 = sphi 0, %s27
      %s31 = sphi 0, %s28
      %s32 = sphi 0, %s29
      %s50 = sphi 0, %s52
      %s53 = sphi 0, %s50
      %s54 = sphi 0, %s53
      %s70 = sphi 0, %s54
      %s80 = sphi 0, %s82
      %s83 = sphi 0, %s80
      %s84 = sphi 0, %s83
      %s100 = sphi 0, %s84
      %s108 = sphi 0, %s110
      %s111 = sphi 0, %s108
      %s112 = sphi 0, %s111
      %s128 = sphi 0, %s112
    $region4: #{tpu_custom_call.1} parent=1 // loop_header_branch
      %20 = sbr.rel (%p18) target = $region8
    $region5: #{tpu_custom_call.1} parent=1 // loop_body
      %s22 = ssub.s32 %s17, 1
      %s23 = ssub.s32 %s17, 2
      %s33 = sadd.s32 1, %s26
      %p34 = scmp.ge.s32.totalorder %s33, 1
      %s35 = scalar_select %p34, 0, %s33
      %s36 = sadd.s32 1, %s25
      %s37 = scalar_select %p34, %s36, %s25
      %p38 = scmp.ge.s32.totalorder %s37, 1
      %s39 = scalar_select %p38, 0, %s37
      %s40 = sadd.s32 1, %s24
      %s41 = scalar_select %p38, %s40, %s24
      %p42 = scmp.ge.s32.totalorder %s41, 2
      %s43 = scalar_select %p42, 0, %s41
      %s44 = sadd.s32 %s25, %s26
      %s45 = sadd.s32 %s39, %s35
      %s46 = ssub.s32 %s24, %s43
      %s47 = ssub.s32 %s44, %s45
      %s48 = sor.u32 %s46, %s47
      %p49 = scmp.eq.s32.totalorder %s48, 0
      %s51 = sadd.s32 %s50, 1
      %s52 = scalar_select %p49, %s50, %s51
      %p55 = pneg %p49
      %p56 = scmp.eq.s32.totalorder %s17, 1
      %p57 = por %p55, %p56
      %p58 = scmp.ne.s32.totalorder %s50, %s53
      %p59 = scmp.eq.s32.totalorder %s17, 0
      %p60 = por %p58, %p59
      %p61 = scmp.ne.s32.totalorder %s50, %s53
      %p62 = scmp.eq.s32.totalorder %s22, 1
      %p63 = por %p61, %p62
      %p64 = scmp.ne.s32.totalorder %s53, %s54
      %p65 = scmp.eq.s32.totalorder %s22, 0
      %p66 = por %p64, %p65
      %p67 = scmp.ne.s32.totalorder %s53, %s54
      %p68 = scmp.eq.s32.totalorder %s23, 1
      %p69 = por %p67, %p68
      %p71 = scmp.ne.s32.totalorder %s54, %s70
      %p72 = scmp.eq.s32.totalorder %s23, 0
      %p73 = por %p71, %p72
      %s74 = sadd.s32 %s25, %s26
      %s75 = sadd.s32 %s39, %s35
      %s76 = ssub.s32 %s24, %s43
      %s77 = ssub.s32 %s74, %s75
      %s78 = sor.u32 %s76, %s77
      %p79 = scmp.eq.s32.totalorder %s78, 0
      %s81 = sadd.s32 %s80, 1
      %s82 = scalar_select %p79, %s80, %s81
      %p85 = pneg %p79
      %p86 = scmp.eq.s32.totalorder %s17, 1
      %p87 = por %p85, %p86
      %p88 = scmp.ne.s32.totalorder %s80, %s83
      %p89 = scmp.eq.s32.totalorder %s17, 0
      %p90 = por %p88, %p89
      %p91 = scmp.ne.s32.totalorder %s80, %s83
      %p92 = scmp.eq.s32.totalorder %s22, 1
      %p93 = por %p91, %p92
      %p94 = scmp.ne.s32.totalorder %s83, %s84
      %p95 = scmp.eq.s32.totalorder %s22, 0
      %p96 = por %p94, %p95
      %p97 = scmp.ne.s32.totalorder %s83, %s84
      %p98 = scmp.eq.s32.totalorder %s23, 1
      %p99 = por %p97, %p98
      %p101 = scmp.ne.s32.totalorder %s84, %s100
      %p102 = scmp.eq.s32.totalorder %s23, 0
      %p103 = por %p101, %p102
      %s104 = sadd.s32 %s24, %s25
      %s105 = sadd.s32 %s43, %s39
      %s106 = ssub.s32 %s104, %s105
      %p107 = scmp.eq.s32.totalorder %s106, 0
      %s109 = sadd.s32 %s108, 1
      %s110 = scalar_select %p107, %s108, %s109
      %p113 = pneg %p107
      %p114 = scmp.eq.s32.totalorder %s17, 1
      %p115 = por %p113, %p114
      %p116 = scmp.ne.s32.totalorder %s108, %s111
      %p117 = scmp.eq.s32.totalorder %s17, 0
      %p118 = por %p116, %p117
      %p119 = scmp.ne.s32.totalorder %s108, %s111
      %p120 = scmp.eq.s32.totalorder %s22, 1
      %p121 = por %p119, %p120
      %p122 = scmp.ne.s32.totalorder %s111, %s112
      %p123 = scmp.eq.s32.totalorder %s22, 0
      %p124 = por %p122, %p123
      %p125 = scmp.ne.s32.totalorder %s111, %s112
      %p126 = scmp.eq.s32.totalorder %s23, 1
      %p127 = por %p125, %p126
      %p129 = scmp.ne.s32.totalorder %s112, %s128
      %p130 = scmp.eq.s32.totalorder %s23, 0
      %p131 = por %p129, %p130
      %p132 = scmp.le.s32.totalorder 1, %s17
      %p133 = scmp.lt.s32.totalorder %s17, 3
      %p134 = pnand %p132, %p133
      %p135 = pneg %p134
      // Predicated region
      $region9: #{tpu_custom_call.1} parent=5 // pred_check
        _
      $region10: #{tpu_custom_call.1} parent=5 // pred_check_branch
        %137 = sbr.rel (%p134) target = $region12
      $region11: #{tpu_custom_call.1} parent=5 // pred_region
        %s138 = ssub.s32 %s17, 1
      $region12: #{tpu_custom_call.1} parent=5 // pred_fallthru
        _
      %p139 = scmp.lt.s32.totalorder %s17, 2
      // Predicated region
      $region13: #{tpu_custom_call.1} parent=5 // pred_check
        %p140 = pneg %p139
      $region14: #{tpu_custom_call.1} parent=5 // pred_check_branch
        %142 = sbr.rel (%p140) target = $region16
      $region15: #{tpu_custom_call.1} parent=5 // pred_region
        // Predicated region
        $region17: #{tpu_custom_call.1} parent=15 // pred_check
          %p143 = pneg %p60
        $region18: #{tpu_custom_call.1} parent=15 // pred_check_branch
          %145 = sbr.rel (%p143) target = $region20
        $region19: #{tpu_custom_call.1} parent=15 // pred_region
          %s146 = sand.u32 %s50, 1
          %s147 = scalar_lea.sflag [#allocation3], %s146
          %s148 = sand.u32 %s50, 1
          %s149 = smul.addr %s148, 8
          %s150 = scalar_lea.vmem [#allocation2], %s149
          %s151 = sadd.s32 %s25, %s26
          %s153 = ssub.s32 128, 128
          %154 = vsyncadd %s147, %s153
          %s155 = smul.addr %s24, 4
          %s156 = sadd.s32 %s151, %s155
          %s157 = smul.addr %s156, 32
          %s158 = scalar_lea.hbm %s0, %s157
          %s159 = sshll.u32 %s150, 4
          %s160 = int_to_ptr.vmem [resolvable:$true] %s159
          %165 = dma.hbm_to_vmem [thread:$0]  %s158, 128, %s160, %s147, 32, 32, 2
        $region20: #{tpu_custom_call.1} parent=15 // pred_fallthru
          _
        // Predicated region
        $region21: #{tpu_custom_call.1} parent=15 // pred_check
          %p166 = pneg %p90
        $region22: #{tpu_custom_call.1} parent=15 // pred_check_branch
          %168 = sbr.rel (%p166) target = $region24
        $region23: #{tpu_custom_call.1} parent=15 // pred_region
          %s169 = sand.u32 %s80, 1
          %s170 = scalar_lea.sflag [#allocation6], %s169
          %s171 = sand.u32 %s80, 1
          %s172 = smul.addr %s171, 8
          %s173 = scalar_lea.vmem [#allocation5], %s172
          %s174 = sadd.s32 %s25, %s26
          %s176 = ssub.s32 128, 128
          %177 = vsyncadd %s170, %s176
          %s178 = smul.addr %s24, 4
          %s179 = sadd.s32 %s174, %s178
          %s180 = smul.addr %s179, 32
          %s181 = scalar_lea.hbm %s1, %s180
          %s182 = sshll.u32 %s173, 4
          %s183 = int_to_ptr.vmem [resolvable:$true] %s182
          %188 = dma.hbm_to_vmem [thread:$0]  %s181, 128, %s183, %s170, 32, 32, 2
        $region24: #{tpu_custom_call.1} parent=15 // pred_fallthru
          _
      $region16: #{tpu_custom_call.1} parent=5 // pred_fallthru
        _
      %p189 = scmp.le.s32.totalorder 1, %s17
      %p190 = scmp.lt.s32.totalorder %s17, 3
      %p191 = pnand %p189, %p190
      %p192 = pneg %p191
      // Predicated region
      $region25: #{tpu_custom_call.1} parent=5 // pred_check
        _
      $region26: #{tpu_custom_call.1} parent=5 // pred_check_branch
        %194 = sbr.rel (%p191) target = $region28
      $region27: #{tpu_custom_call.1} parent=5 // pred_region
        %s195 = ssub.s32 %s17, 1
        %s196 = sand.u32 %s53, 1
        %s197 = scalar_lea.sflag [#allocation3], %s196
        %s198 = sand.u32 %s53, 1
        %s199 = smul.addr %s198, 8
        %s200 = scalar_lea.vmem [#allocation2], %s199
        // Predicated region
        $region29: #{tpu_custom_call.1} parent=27 // pred_check
          %p201 = pneg %p66
        $region30: #{tpu_custom_call.1} parent=27 // pred_check_branch
          %203 = sbr.rel (%p201) target = $region32
        $region31: #{tpu_custom_call.1} parent=27 // pred_region
          %204 = dma.done %s197, 128
        $region32: #{tpu_custom_call.1} parent=27 // pred_fallthru
          _
        %s205 = sand.u32 %s83, 1
        %s206 = scalar_lea.sflag [#allocation6], %s205
        %s207 = sand.u32 %s83, 1
        %s208 = smul.addr %s207, 8
        %s209 = scalar_lea.vmem [#allocation5], %s208
        // Predicated region
        $region33: #{tpu_custom_call.1} parent=27 // pred_check
          %p210 = pneg %p96
        $region34: #{tpu_custom_call.1} parent=27 // pred_check_branch
          %212 = sbr.rel (%p210) target = $region36
        $region35: #{tpu_custom_call.1} parent=27 // pred_region
          %213 = dma.done %s206, 128
        $region36: #{tpu_custom_call.1} parent=27 // pred_fallthru
          _
        %s214 = sand.u32 %s53, 1
        %s215 = scalar_lea.sflag [#allocation3], %s214
        %s216 = sand.u32 %s53, 1
        %s217 = smul.addr %s216, 8
        %s218 = scalar_lea.vmem [#allocation2], %s217
        %p219 = pneg %p66
        %p220 = pneg %p63
        %s221 = sand.u32 %s83, 1
        %s222 = scalar_lea.sflag [#allocation6], %s221
        %s223 = sand.u32 %s83, 1
        %s224 = smul.addr %s223, 8
        %s225 = scalar_lea.vmem [#allocation5], %s224
        %p226 = pneg %p96
        %p227 = pneg %p93
        %p228 = pneg %p124
        %p229 = pneg %p121
        %s230 = sand.u32 %s111, 1
        %s231 = scalar_lea.sflag [#allocation4], %s230
        %s232 = sand.u32 %s111, 1
        %s233 = smul.addr %s232, 24
        %s234 = scalar_lea.vmem [#allocation7], %s233
        %s235 = sadd.s32 %s28, %s29
        %s236 = sadd.s32 %s28, %s29
        %s237 = sadd.s32 %s27, %s28
        %p238 = scmp.eq.s32.totalorder %s29, 0
        // Predicated region
        $region37: #{tpu_custom_call.1} parent=27 // pred_check
          %p239 = pneg %p238
        $region38: #{tpu_custom_call.1} parent=27 // pred_check_branch
          %241 = sbr.rel (%p239) target = $region40
        $region39: #{tpu_custom_call.1} parent=27 // pred_region
          %242 = vst [vmem:[%s234] sm:$0x3] 0.0
          %243 = vst [vmem:[%s234 + $0x2] sm:$0x3] 0.0
          %244 = vst [vmem:[%s234 + $0x4] sm:$0x3] 0.0
          %245 = vst [vmem:[%s234 + $0x6] sm:$0x3] 0.0
          %246 = vst [vmem:[%s234 + $0x8] sm:$0x3] 0.0
          %247 = vst [vmem:[%s234 + $0xa] sm:$0x3] 0.0
          %248 = vst [vmem:[%s234 + $0xc] sm:$0x3] 0.0
          %249 = vst [vmem:[%s234 + $0xe] sm:$0x3] 0.0
          %250 = vst [vmem:[%s234 + $0x10] sm:$0x3] 0.0
          %251 = vst [vmem:[%s234 + $0x12] sm:$0x3] 0.0
          %252 = vst [vmem:[%s234 + $0x14] sm:$0x3] 0.0
          %253 = vst [vmem:[%s234 + $0x16] sm:$0x3] 0.0
        $region40: #{tpu_custom_call.1} parent=27 // pred_fallthru
          _
        %v254 = vld [vmem:[%s200] sm:$0x3]
        %v255 = vld [vmem:[%s200 + $0x2] sm:$0x3]
        %v256 = vld [vmem:[%s200 + $0x4] sm:$0x3]
        %v257 = vld [vmem:[%s200 + $0x6] sm:$0x3]
        %v258 = vld [vmem:[%s209] sm:$0x3]
        %v259 = vld [vmem:[%s209 + $0x2] sm:$0x3]
        %v260 = vld [vmem:[%s209 + $0x4] sm:$0x3]
        %v261 = vld [vmem:[%s209 + $0x6] sm:$0x3]
        %vm262 = vcmask 1041408
        %v263 = vsel %vm262, %v254, -inf
        %v264 = vsel %vm262, %v255, -inf
        %v265 = vsel %vm262, %v256, -inf
        %v266 = vsel %vm262, %v257, -inf
        %v267 = vmax.f32 %v263, %v264
        %v268 = vmax.f32 %v265, %v266
        %v269 = vmax.f32 %v267, %v268
        %v270 = vsub.f32 %v254, %v269
        %v271 = vsub.f32 %v255, %v269
        %v272 = vsub.f32 %v256, %v269
        %v273 = vsub.f32 %v257, %v269
        %v274 = vmul.f32 %v270, 1.442695
        %v275 = vpow.pop %v274
        %v276 = vmul.f32 %v271, 1.442695
        %v277 = vpow.pop %v276
        %v278 = vmul.f32 %v272, 1.442695
        %v279 = vpow.pop %v278
        %v280 = vmul.f32 %v273, 1.442695
        %v281 = vpow.pop %v280
        %v282 = vsel %vm262, %v275, 0.0
        %v283 = vsel %vm262, %v277, 0.0
        %v284 = vadd.f32 %v282, %v283
        %v285 = vsel %vm262, %v279, 0.0
        %v286 = vadd.f32 %v284, %v285
        %v287 = vsel %vm262, %v281, 0.0
        %v288 = vadd.f32 %v286, %v287
        %v289 = vrcp.pop %v288
        %v290 = vmul.f32 %v288, %v289
        %v291 = vsub.f32 2.0, %v290
        %v292 = vmul.f32 %v289, %v291
        %v293 = vmul.f32 %v275, %v292
        %v294 = vmul.f32 %v277, %v292
        %v295 = vmul.f32 %v279, %v292
        %v296 = vmul.f32 %v281, %v292
        %v297 = vld [vmem:[%s234] sm:$0x3]
        %v298 = vld [vmem:[%s234 + $0x2] sm:$0x3]
        %v299 = vld [vmem:[%s234 + $0x4] sm:$0x3]
        %v300 = vld [vmem:[%s234 + $0x6] sm:$0x3]
        %v301 = vadd.f32 %v297, %v293
        %v302 = vadd.f32 %v298, %v294
        %v303 = vadd.f32 %v299, %v295
        %v304 = vadd.f32 %v300, %v296
        %305 = vst [vmem:[%s234] sm:$0x3] %v301
        %306 = vst [vmem:[%s234 + $0x2] sm:$0x3] %v302
        %307 = vst [vmem:[%s234 + $0x4] sm:$0x3] %v303
        %308 = vst [vmem:[%s234 + $0x6] sm:$0x3] %v304
        %s309 = scalar_lea.vmem %s234, 8 [#allocation7]
        %v310 = vld [vmem:[%s309] sm:$0x3]
        %v311 = vld [vmem:[%s309 + $0x2] sm:$0x3]
        %v312 = vld [vmem:[%s309 + $0x4] sm:$0x3]
        %v313 = vld [vmem:[%s309 + $0x6] sm:$0x3]
        %v314 = vadd.f32 %v310, %v258
        %v315 = vadd.f32 %v311, %v259
        %v316 = vadd.f32 %v312, %v260
        %v317 = vadd.f32 %v313, %v261
        %318 = vst [vmem:[%s309] sm:$0x3] %v314
        %319 = vst [vmem:[%s309 + $0x2] sm:$0x3] %v315
        %320 = vst [vmem:[%s309 + $0x4] sm:$0x3] %v316
        %321 = vst [vmem:[%s309 + $0x6] sm:$0x3] %v317
        %s322 = scalar_lea.vmem %s234, 16 [#allocation7]
        %v323 = vld [vmem:[%s322] sm:$0x3]
        %v324 = vld [vmem:[%s322 + $0x2] sm:$0x3]
        %v325 = vld [vmem:[%s322 + $0x4] sm:$0x3]
        %v326 = vld [vmem:[%s322 + $0x6] sm:$0x3]
        %v327 = vmul.f32 %v293, %v258
        %v328 = vmul.f32 %v294, %v259
        %v329 = vmul.f32 %v295, %v260
        %v330 = vmul.f32 %v296, %v261
        %v331 = vadd.f32 %v323, %v327
        %v332 = vadd.f32 %v324, %v328
        %v333 = vadd.f32 %v325, %v329
        %v334 = vadd.f32 %v326, %v330
        %335 = vst [vmem:[%s322] sm:$0x3] %v331
        %336 = vst [vmem:[%s322 + $0x2] sm:$0x3] %v332
        %337 = vst [vmem:[%s322 + $0x4] sm:$0x3] %v333
        %338 = vst [vmem:[%s322 + $0x6] sm:$0x3] %v334
        %s339 = sand.u32 %s111, 1
        %s340 = scalar_lea.sflag [#allocation4], %s339
        %s341 = sand.u32 %s111, 1
        %s342 = smul.addr %s341, 24
        %s343 = scalar_lea.vmem [#allocation7], %s342
        // Predicated region
        $region41: #{tpu_custom_call.1} parent=27 // pred_check
          %p344 = pneg %p121
        $region42: #{tpu_custom_call.1} parent=27 // pred_check_branch
          %346 = sbr.rel (%p344) target = $region44
        $region43: #{tpu_custom_call.1} parent=27 // pred_region
          %s347 = sadd.s32 %s27, %s28
          %s349 = ssub.s32 384, 384
          %350 = vsyncadd %s340, %s349
          %s351 = smul.addr %s347, 12
          %s352 = smul.addr %s351, 32
          %s353 = scalar_lea.hbm %s2, %s352
          %s354 = sshll.u32 %s343, 4
          %s355 = int_to_ptr.vmem [resolvable:$true] %s354
          %360 = dma.vmem_to_hbm [thread:$0]  %s355, 384, %s353, %s340, 32, 32, 2
        $region44: #{tpu_custom_call.1} parent=27 // pred_fallthru
          _
      $region28: #{tpu_custom_call.1} parent=5 // pred_fallthru
        _
      %p361 = scmp.le.s32.totalorder 2, %s17
      // Predicated region
      $region45: #{tpu_custom_call.1} parent=5 // pred_check
        %p362 = pneg %p361
      $region46: #{tpu_custom_call.1} parent=5 // pred_check_branch
        %364 = sbr.rel (%p362) target = $region48
      $region47: #{tpu_custom_call.1} parent=5 // pred_region
        %s365 = ssub.s32 %s17, 2
        // Predicated region
        $region49: #{tpu_custom_call.1} parent=47 // pred_check
          %p366 = pneg %p127
        $region50: #{tpu_custom_call.1} parent=47 // pred_check_branch
          %368 = sbr.rel (%p366) target = $region52
        $region51: #{tpu_custom_call.1} parent=47 // pred_region
          %s369 = sand.u32 %s112, 1
          %s370 = scalar_lea.sflag [#allocation4], %s369
          %s371 = sand.u32 %s112, 1
          %s372 = smul.addr %s371, 24
          %s373 = scalar_lea.vmem [#allocation7], %s372
          %374 = dma.done %s370, 384
        $region52: #{tpu_custom_call.1} parent=47 // pred_fallthru
          _
      $region48: #{tpu_custom_call.1} parent=5 // pred_fallthru
        _
    $region6: #{tpu_custom_call.1} parent=1 // loop_footer
      %s21 = sadd.s32 1, %s17
    $region7: #{tpu_custom_call.1} parent=1 // loop_footer_branch
      %16 = sbr.rel target = $region3
    $region8: #{tpu_custom_call.1} parent=1 // loop_exit
      _
    %375 = vsyncpa [#allocation3], 1
    %s376 = scalar_lea.sflag [#allocation3], 1
    %377 = vsyncpa %s376, 1
    %378 = vsyncpa [#allocation6], 1
    %s379 = scalar_lea.sflag [#allocation6], 1
    %380 = vsyncpa %s379, 1
    %381 = vsyncpa [#allocation4], 1
    %s382 = scalar_lea.sflag [#allocation4], 1
    %383 = vsyncpa %s382, 1

</llo_original>
